<compile_context>
chip_gen: v5e
topology: v5e:2x2
jax: 0.10.0
libtpu: 0.0.40
codegen_flags: <defaults>
</compile_context>

<pallas_src>
import jax
import jax.numpy as jnp
from jax.experimental import pallas as pl
from jax.experimental.pallas import tpu as pltpu

_LANE = 128


def _dense_site_net_kernel(x_ref, w1_ref, b1_ref, w2_ref, b2_ref, out_ref, acc_ref):
    k = pl.program_id(1)

    @pl.when(k == 0)
    def _init():
        acc_ref[...] = jnp.zeros_like(acc_ref)

    # Layer 1 on the MXU: bf16 x/W1 tiles, f32 accumulation in VMEM scratch.
    acc_ref[...] += jnp.dot(
        x_ref[...], w1_ref[...], preferred_element_type=jnp.float32
    )

    @pl.when(k == pl.num_programs(1) - 1)
    def _finalize():
        h = jnp.maximum(acc_ref[...] + b1_ref[...], 0.0)       # bias + ReLU (f32, VPU)
        # Dropout(0.2): identity at inference time.
        # Layer 2 as VPU multiply + XLU lane reduction; padded hidden units
        # contribute exactly zero.  b2 is a scalar read from SMEM.
        out = jnp.sum(h * w2_ref[...], axis=-1, keepdims=True) + b2_ref[0]
        out_ref[...] = out.astype(out_ref.dtype)


def prepare_params(w1, b1, w2, b2, *, max_w1_tile_k=8192, w1_resident_bytes=24 << 20):
    """One-time parameter prep (hoisted out of the hot forward path).

    w1: (D, H)  b1: (H,)  w2: (H, 1)  b2: (1,)   [W stored (in, out), i.e.
    transposed from nn.Linear's (out, in)].

    Pads the hidden dim to a 128-lane multiple, casts the streamed matmul
    operand W1 to bf16, and decides the K tile (tk = D when W1 fits VMEM
    double-buffered, else a 128-multiple with D zero-padded up to tk*nk).
    """
    D, H = w1.shape
    h_pad = pl.cdiv(H, _LANE) * _LANE

    if 2 * D * h_pad * 2 <= w1_resident_bytes:      # double-buffered bf16 W1 fits
        tk, d_pad = D, D
    else:                                           # rare large-D path: K-tiling
        tk = max(_LANE, (max_w1_tile_k // _LANE) * _LANE)
        d_pad = pl.cdiv(D, tk) * tk

    w1_p = jnp.zeros((d_pad, h_pad), jnp.bfloat16)
    w1_p = w1_p.at[:D, :H].set(w1.astype(jnp.bfloat16))
    b1_p = jnp.zeros((1, h_pad), jnp.float32).at[:, :H].set(
        b1.reshape(1, H).astype(jnp.float32))
    w2_p = jnp.zeros((1, h_pad), jnp.float32).at[:, :H].set(
        w2.reshape(1, H).astype(jnp.float32))
    b2_s = b2.reshape(1).astype(jnp.float32)
    return {"w1": w1_p, "b1": b1_p, "w2": w2_p, "b2": b2_s,
            "d_in": D, "tile_k": tk}


def dense_site_net_forward(x, params, *, target_x_tile_bytes=4 << 20,
                           vmem_budget_bytes=40 << 20):
    """x: (B, n_sites, n_features) -> (B, 1) float32 (eval-mode dropout)."""
    B = x.shape[0]
    w1_p, b1_p, w2_p, b2_s = params["w1"], params["b1"], params["w2"], params["b2"]
    D, tk = params["d_in"], params["tile_k"]
    d_pad, h_pad = w1_p.shape

    # Row-major flatten (== torch .view) and bf16 cast of the streamed operand.
    x_flat = x.reshape(B, -1).astype(jnp.bfloat16)
    assert x_flat.shape[1] == D, (x_flat.shape, D)
    if d_pad != D:
        # Large-D path only: pad flattened features so the K grid tiles evenly
        # (padded W1 rows are zero, so this is numerically exact).
        x_flat = jnp.pad(x_flat, ((0, 0), (0, d_pad - D)))
    nk = d_pad // tk

    # --- D-aware batch tile, capped by an explicit VMEM budget -------------
    # Budget accounts for: double-buffered bf16 x tile, double-buffered bf16
    # W1 tile, f32 accumulator, double-buffered out/b1/w2 blocks.
    fixed_bytes = 2 * tk * h_pad * 2 + 4 * h_pad * 4 + 4096
    per_row_bytes = 2 * tk * 2 + h_pad * 4 + 2 * 4
    tb_cap = max(16, (vmem_budget_bytes - fixed_bytes) // per_row_bytes)
    tb = target_x_tile_bytes // (tk * 2)            # rows for a ~4 MiB bf16 tile
    tb = min(tb, tb_cap)
    tb = max(16, (tb // 16) * 16)                   # sublane-friendly for bf16
    if tb >= B:
        tb = B                                      # full-dim block is always legal
    nb = pl.cdiv(B, tb)

    needed = (2 * tb * tk * 2 + 2 * tk * h_pad * 2 + tb * h_pad * 4
              + 2 * tb * 4 + 4 * h_pad * 4)
    vmem_limit = int(min(max(needed + needed // 2 + (2 << 20), 16 << 20), 48 << 20))

    cost = pl.CostEstimate(
        flops=2 * B * d_pad * h_pad + 3 * B * h_pad,
        transcendentals=0,
        bytes_accessed=B * d_pad * 2 + d_pad * h_pad * 2 + 2 * h_pad * 4 + B * 4,
    )

    out = pl.pallas_call(
        _dense_site_net_kernel,
        out_shape=jax.ShapeDtypeStruct((B, 1), jnp.float32),
        grid_spec=pltpu.PrefetchScalarGridSpec(
            num_scalar_prefetch=0,
            grid=(nb, nk),
            in_specs=[
                pl.BlockSpec((tb, tk), lambda i, k: (i, k)),        # x: streamed (bf16)
                pl.BlockSpec((tk, h_pad), lambda i, k: (k, 0)),     # W1: resident / K-streamed
                pl.BlockSpec((1, h_pad), lambda i, k: (0, 0)),      # b1 (f32)
                pl.BlockSpec((1, h_pad), lambda i, k: (0, 0)),      # W2 row (f32)
                pl.BlockSpec(memory_space=pltpu.MemorySpace.SMEM),  # b2 scalar
            ],
            out_specs=pl.BlockSpec((tb, 1), lambda i, k: (i, 0)),
            scratch_shapes=[pltpu.VMEM((tb, h_pad), jnp.float32)],  # layer-1 accumulator
        ),
        compiler_params=pltpu.CompilerParams(
            dimension_semantics=("parallel", "arbitrary"),
            vmem_limit_bytes=vmem_limit,
        ),
        cost_estimate=cost,
    )(x_flat, w1_p, b1_p, w2_p, b2_s)
    return out


def init_params(key, n_features, n_sites, hidden=100):
    """Deterministic init mimicking nn.Linear default (uniform +- 1/sqrt(fan_in))."""
    d_in = n_sites * n_features
    k1, k2, k3, k4 = jax.random.split(key, 4)
    bound1 = 1.0 / jnp.sqrt(d_in)
    bound2 = 1.0 / jnp.sqrt(hidden)
    w1 = jax.random.uniform(k1, (d_in, hidden), jnp.float32, -bound1, bound1)
    b1 = jax.random.uniform(k2, (hidden,), jnp.float32, -bound1, bound1)
    w2 = jax.random.uniform(k3, (hidden, 1), jnp.float32, -bound2, bound2)
    b2 = jax.random.uniform(k4, (1,), jnp.float32, -bound2, bound2)
    return w1, b1, w2, b2


if __name__ == "__main__":
    key = jax.random.PRNGKey(0)
    kx, kp = jax.random.split(key)

    batch, n_sites, n_features = 2, 8, 4
    x = jax.random.normal(kx, (batch, n_sites, n_features), dtype=jnp.float32)
    w1, b1, w2, b2 = init_params(kp, n_features, n_sites)

    params = prepare_params(w1, b1, w2, b2)          # one-time prep (not in hot path)
    out = dense_site_net_forward(x, params)
    out = jax.block_until_ready(out)

    # Reference in plain JAX against the same bf16-rounded streamed operands
    # (f32 accumulation), eval-mode dropout == identity.
    x_bf = x.reshape(batch, -1).astype(jnp.bfloat16).astype(jnp.float32)
    w1_bf = w1.astype(jnp.bfloat16).astype(jnp.float32)
    ref = jnp.maximum(x_bf @ w1_bf + b1, 0.0) @ w2 + b2

    assert out.shape == (batch, 1), out.shape
    assert jnp.allclose(out, ref, atol=1e-3, rtol=1e-3), (out, ref)

    print("KERNEL_OK")
</pallas_src>

<mosaic_0001>
module attributes {stable_mosaic.version = 11 : i64} {
  func.func @_dense_site_net_kernel(%arg0: i32, %arg1: i32, %arg2: memref<2x32xbf16, #tpu.memory_space<vmem>>, %arg3: memref<32x128xbf16, #tpu.memory_space<vmem>>, %arg4: memref<1x128xf32, #tpu.memory_space<vmem>>, %arg5: memref<1x128xf32, #tpu.memory_space<vmem>>, %arg6: memref<1xf32, #tpu.memory_space<smem>>, %arg7: memref<2x1xf32, #tpu.memory_space<vmem>>, %arg8: memref<2x128xf32, #tpu.memory_space<vmem>>) attributes {dimension_semantics = [#tpu.dimension_semantics<parallel>, #tpu.dimension_semantics<arbitrary>], iteration_bounds = array<i64: 1, 1>, scalar_prefetch = 0 : i64, scratch_operands = 1 : i64, tpu.core_type = #tpu.core_type<tc>, window_params = [{transform_indices = @transform_0, window_bounds = array<i64: 2, 32>}, {transform_indices = @transform_1, window_bounds = array<i64: 32, 128>}, {pipeline_mode = #tpu.pipeline_mode<synchronous>, transform_indices = @transform_2, window_bounds = array<i64: 1, 128>}, {pipeline_mode = #tpu.pipeline_mode<synchronous>, transform_indices = @transform_3, window_bounds = array<i64: 1, 128>}, {transform_indices = @transform_4, window_bounds = array<i64: 1>}, {transform_indices = @transform_5, window_bounds = array<i64: 2, 1>}]} {
    %c0_i32 = arith.constant 0 : i32
    %0 = arith.cmpi eq, %arg1, %c0_i32 : i32
    %1 = arith.extui %0 : i1 to i32
    %c0_i32_0 = arith.constant 0 : i32
    %2 = arith.cmpi ne, %1, %c0_i32_0 : i32
    scf.if %2 {
      %cst_10 = arith.constant 0.000000e+00 : f32
      %12 = vector.broadcast %cst_10 : f32 to vector<2x128xf32>
      %c0_11 = arith.constant 0 : index
      %c0_12 = arith.constant 0 : index
      %13 = vector.load %arg8[%c0_11, %c0_12] : memref<2x128xf32, #tpu.memory_space<vmem>>, vector<2x128xf32>
      tpu.vector_store %arg8[%c0_11, %c0_12], %12 {strides = array<i32>} : memref<2x128xf32, #tpu.memory_space<vmem>>, vector<2x128xf32>,
    } else {
    }
    %c0 = arith.constant 0 : index
    %c0_1 = arith.constant 0 : index
    %3 = vector.load %arg8[%c0, %c0_1] : memref<2x128xf32, #tpu.memory_space<vmem>>, vector<2x128xf32>
    %c0_2 = arith.constant 0 : index
    %c0_3 = arith.constant 0 : index
    %4 = vector.load %arg2[%c0_2, %c0_3] : memref<2x32xbf16, #tpu.memory_space<vmem>>, vector<2x32xbf16>
    %c0_4 = arith.constant 0 : index
    %c0_5 = arith.constant 0 : index
    %5 = vector.load %arg3[%c0_4, %c0_5] : memref<32x128xbf16, #tpu.memory_space<vmem>>, vector<32x128xbf16>
    %cst = arith.constant dense<0.000000e+00> : vector<2x128xf32>
    %6 = tpu.matmul %4, %5, %cst {dimension_numbers = #tpu.dot_dimension_numbers<[1], [0], [0], [1], [0, 0, 1, 1], [], []>} : vector<2x32xbf16>, vector<32x128xbf16>, vector<2x128xf32> -> vector<2x128xf32>
    %7 = arith.addf %3, %6 : vector<2x128xf32>
    %c0_6 = arith.constant 0 : index
    %c0_7 = arith.constant 0 : index
    %8 = vector.load %arg8[%c0_6, %c0_7] : memref<2x128xf32, #tpu.memory_space<vmem>>, vector<2x128xf32>
    tpu.vector_store %arg8[%c0_6, %c0_7], %7 {strides = array<i32>} : memref<2x128xf32, #tpu.memory_space<vmem>>, vector<2x128xf32>,
    %c0_i32_8 = arith.constant 0 : i32
    %9 = arith.cmpi eq, %arg1, %c0_i32_8 : i32
    %10 = arith.extui %9 : i1 to i32
    %c0_i32_9 = arith.constant 0 : i32
    %11 = arith.cmpi ne, %10, %c0_i32_9 : i32
    scf.if %11 {
      %c0_10 = arith.constant 0 : index
      %c0_11 = arith.constant 0 : index
      %12 = vector.load %arg8[%c0_10, %c0_11] : memref<2x128xf32, #tpu.memory_space<vmem>>, vector<2x128xf32>
      %c0_12 = arith.constant 0 : index
      %c0_13 = arith.constant 0 : index
      %13 = vector.load %arg4[%c0_12, %c0_13] : memref<1x128xf32, #tpu.memory_space<vmem>>, vector<1x128xf32>
      %14 = vector.broadcast %13 : vector<1x128xf32> to vector<2x128xf32>
      %15 = arith.addf %12, %14 : vector<2x128xf32>
      %cst_14 = arith.constant 0.000000e+00 : f32
      %16 = vector.broadcast %cst_14 : f32 to vector<2x128xf32>
      %17 = arith.maximumf %15, %16 : vector<2x128xf32>
      %c0_15 = arith.constant 0 : index
      %c0_16 = arith.constant 0 : index
      %18 = vector.load %arg5[%c0_15, %c0_16] : memref<1x128xf32, #tpu.memory_space<vmem>>, vector<1x128xf32>
      %19 = vector.broadcast %18 : vector<1x128xf32> to vector<2x128xf32>
      %20 = arith.mulf %17, %19 : vector<2x128xf32>
      %cst_17 = arith.constant dense<0.000000e+00> : vector<2xf32>
      %21 = vector.multi_reduction <add>, %20, %cst_17 [1] : vector<2x128xf32> to vector<2xf32>
      %22 = vector.shape_cast %21 : vector<2xf32> to vector<2x1xf32>
      %c0_18 = arith.constant 0 : index
      %23 = memref.load %arg6[%c0_18] : memref<1xf32, #tpu.memory_space<smem>>
      %24 = vector.broadcast %23 : f32 to vector<2x1xf32>
      %25 = arith.addf %22, %24 : vector<2x1xf32>
      %c0_19 = arith.constant 0 : index
      %c0_20 = arith.constant 0 : index
      %26 = vector.load %arg7[%c0_19, %c0_20] : memref<2x1xf32, #tpu.memory_space<vmem>>, vector<2x1xf32>
      tpu.vector_store %arg7[%c0_19, %c0_20], %25 {strides = array<i32>} : memref<2x1xf32, #tpu.memory_space<vmem>>, vector<2x1xf32>,
    } else {
    }
    return
  }
  func.func @transform_0(%arg0: i32, %arg1: i32) -> (i32, i32) {
    %c0_i32 = arith.constant 0 : i32
    return %arg0, %arg1 : i32, i32
  }
  func.func @transform_1(%arg0: i32, %arg1: i32) -> (i32, i32) {
    %c0_i32 = arith.constant 0 : i32
    %c0_i32_0 = arith.constant 0 : i32
    return %arg1, %c0_i32 : i32, i32
  }
  func.func @transform_2(%arg0: i32, %arg1: i32) -> (i32, i32) {
    %c0_i32 = arith.constant 0 : i32
    %c0_i32_0 = arith.constant 0 : i32
    %c0_i32_1 = arith.constant 0 : i32
    return %c0_i32, %c0_i32_0 : i32, i32
  }
  func.func @transform_3(%arg0: i32, %arg1: i32) -> (i32, i32) {
    %c0_i32 = arith.constant 0 : i32
    %c0_i32_0 = arith.constant 0 : i32
    %c0_i32_1 = arith.constant 0 : i32
    return %c0_i32, %c0_i32_0 : i32, i32
  }
  func.func @transform_4(%arg0: i32, %arg1: i32) -> i32 {
    %c0_i32 = arith.constant 0 : i32
    %c0_i32_0 = arith.constant 0 : i32
    return %c0_i32 : i32
  }
  func.func @transform_5(%arg0: i32, %arg1: i32) -> (i32, i32) {
    %c0_i32 = arith.constant 0 : i32
    %c0_i32_0 = arith.constant 0 : i32
    return %arg0, %c0_i32 : i32, i32
  }
}

</mosaic_0001>

<llo_original>
// kernel: tpu_custom_call.1
$region0: #{tpu_custom_call.1}
  #allocation0 [shape = 'u32[]', space=smem, size = 0x4, offset = 0x4, fixed_abs, tag = 'smem constant byte address 0x4 - core index']
  #allocation1 [shape = 'u32[72,128]{1,0:T(1,128)}', space=vmem, size = 0x9000, scoped, tag = 'internal scratch']
  #allocation2 [shape = 'f32[2,128]{1,0:T(2,128)}', space=vmem, size = 0x400, scoped, tag = 'scratch operand']
  #allocation3 [shape = 'f32[1]{0:T(128)S(6)}', space=smem, size = 0x200, scoped, tag = 'scoped memory for tpu_custom_call.1']
  %s0 = inlined_call_operand.vmem [shape: bf16[2,32], index: 0, kind: input, shape index: {}]
  %s1 = inlined_call_operand.hbm [shape: bf16[32,128], index: 1, kind: input, shape index: {}]
  %s2 = inlined_call_operand.vmem [shape: f32[1,128], index: 2, kind: input, shape index: {}]
  %s3 = inlined_call_operand.vmem [shape: f32[1,128], index: 3, kind: input, shape index: {}]
  %s4 = inlined_call_operand.<no memory space> [shape: f32[1], index: 4, kind: input, shape index: {}]
  %s5 = inlined_call_operand.vmem [shape: f32[2,1], index: 5, kind: output, shape index: {}]
  %s6 = sld [smem:[#allocation0]]
  $region42: #{tpu_custom_call.1} parent=0
    _
  %s8 = ssub.s32 1, %s6
  %s9 = scalar_select 0, %s8, %s6
  %10 = sst [smem:[#allocation3]] %s4
  $region1: #{tpu_custom_call.1} parent=0
    #allocation4 [shape = 'u8[8192]{0}', space=vmem, size = 0x2000, scoped, tag = 'input window, operand 1, single buffered']
    #allocation5 [shape = 's32[1]{0}', space=sflag, size = 0x4, scoped, tag = 'scoped memory for tpu_custom_call.1']
    %11 = vsyncpa [#allocation5], 0
    // Predicated region
    $region2: #{tpu_custom_call.1} parent=1 // pred_check
      _
    $region3: #{tpu_custom_call.1} parent=1 // pred_check_branch
      %13 = sbr.rel (0) target = $region5
    $region4: #{tpu_custom_call.1} parent=1 // pred_region
      _
    $region5: #{tpu_custom_call.1} parent=1 // pred_fallthru
      _
    // Predicated region
    $region6: #{tpu_custom_call.1} parent=1 // pred_check
      _
    $region7: #{tpu_custom_call.1} parent=1 // pred_check_branch
      %15 = sbr.rel (0) target = $region9
    $region8: #{tpu_custom_call.1} parent=1 // pred_region
      %17 = vsyncadd [#allocation5], 0
      %s18 = sshll.u32 %s1, 4
      %s19 = int_to_ptr.hbm [resolvable:$true] %s18
      %s20 = sshll.u32 [#allocation4], 4
      %s21 = int_to_ptr.vmem [resolvable:$true] %s20
      %26 = dma.hbm_to_vmem [thread:$0]  %s19, 256, %s21, [#allocation5], 64, 64, 4
    $region9: #{tpu_custom_call.1} parent=1 // pred_fallthru
      _
    // Predicated region
    $region10: #{tpu_custom_call.1} parent=1 // pred_check
      _
    $region11: #{tpu_custom_call.1} parent=1 // pred_check_branch
      %28 = sbr.rel (0) target = $region13
    $region12: #{tpu_custom_call.1} parent=1 // pred_region
      _
    $region13: #{tpu_custom_call.1} parent=1 // pred_fallthru
      _
    // Predicated region
    $region14: #{tpu_custom_call.1} parent=1 // pred_check
      _
    $region15: #{tpu_custom_call.1} parent=1 // pred_check_branch
      %30 = sbr.rel (0) target = $region17
    $region16: #{tpu_custom_call.1} parent=1 // pred_region
      _
    $region17: #{tpu_custom_call.1} parent=1 // pred_fallthru
      _
    // Predicated region
    $region18: #{tpu_custom_call.1} parent=1 // pred_check
      _
    $region19: #{tpu_custom_call.1} parent=1 // pred_check_branch
      %32 = sbr.rel (0) target = $region21
    $region20: #{tpu_custom_call.1} parent=1 // pred_region
      _
    $region21: #{tpu_custom_call.1} parent=1 // pred_fallthru
      _
    // Predicated region
    $region22: #{tpu_custom_call.1} parent=1 // pred_check
      _
    $region23: #{tpu_custom_call.1} parent=1 // pred_check_branch
      %34 = sbr.rel (0) target = $region25
    $region24: #{tpu_custom_call.1} parent=1 // pred_region
      %36 = dma.done [#allocation5], 256
    $region25: #{tpu_custom_call.1} parent=1 // pred_fallthru
      _
    %p38 = scmp.eq.s32.totalorder 0, 0
    // Predicated region
    $region26: #{tpu_custom_call.1} parent=1 // pred_check
      %p39 = pneg %p38
    $region27: #{tpu_custom_call.1} parent=1 // pred_check_branch
      %41 = sbr.rel (%p39) target = $region29
    $region28: #{tpu_custom_call.1} parent=1 // pred_region
      %42 = vst [vmem:[#allocation2] sm:$0x3] 0.0
    $region29: #{tpu_custom_call.1} parent=1 // pred_fallthru
      _
    %v43 = vld [vmem:[#allocation2] sm:$0x3]
    %v44 = vld [vmem:[%s0] sm:$0x1]
    %v45 = vld [vmem:[#allocation4] sm:$0xf]
    %v46 = vld [vmem:[#allocation4 + $0x4] sm:$0xf]
    %v47 = vld [vmem:[#allocation4 + $0x8] sm:$0xf]
    %v48 = vld [vmem:[#allocation4 + $0xc] sm:$0xf]
    %v53 = vunpack.c.l.b16 %v45
    %v54 = vunpack.c.l.b16 %v46
    %v55 = vunpack.c.l.b16 %v47
    %v56 = vunpack.c.l.b16 %v48
    %v57 = vpack.c.b16 %v54, %v53
    %v58 = vpack.c.b16 %v56, %v55
    %vm61 = vcmask 261120
    %v63 = vsel %vm61, %v44, 0
    %65 = vmatpush.bf16.msra.mxu0 0
    %66 = vmatpush.bf16.msra.mxu0 0
    %67 = vmatpush.bf16.msra.mxu0 0
    %68 = vmatpush.bf16.msra.mxu0 0
    %69 = vmatpush.bf16.msra.mxu0 0
    %70 = vmatpush.bf16.msra.mxu0 0
    %71 = vmatpush.bf16.msra.mxu0 %v58
    %72 = vmatpush.bf16.msra.mxu0 %v57
    %73 = vmatmul.bf16.gmra.mxu0 %v63
    %v74 = vpop.f32.mrf.mxu0
    %v75 = vadd.f32 0.0, %v74
    %v76 = vpop.f32.mrf.mxu0
    %77 = vdwg.mxu0
    %v78 = vadd.f32 %v43, %v75
    %79 = vst [vmem:[#allocation2] sm:$0x3] %v78
    // Predicated region
    $region30: #{tpu_custom_call.1} parent=1 // pred_check
      %p80 = pneg %p38
    $region31: #{tpu_custom_call.1} parent=1 // pred_check_branch
      %82 = sbr.rel (%p80) target = $region33
    $region32: #{tpu_custom_call.1} parent=1 // pred_region
      %v83 = vld [vmem:[#allocation2] sm:$0x3]
      %v84 = vld [vmem:[%s2] sm:$0x1]
      %v86 = vperm.slane %v84, 0
      %v88 = vadd.f32 %v83, %v86
      %v89 = vmax.f32 %v88, 0.0
      %v90 = vld [vmem:[%s3] sm:$0x1]
      %v92 = vperm.slane %v90, 0
      %v94 = vmul.f32 %v89, %v92
      %vm95 = vcmask 1041408
      %v96 = vsel %vm95, %v94, 0.0
      %97 = vadd.xlane.f32.xlu0 %v96
      %v98 = vpop.xlane.xlu0 %97
      %s99 = sld [smem:[#allocation3]]
      %v100 = vstv %s99
      %v101 = vadd.f32 %v98, %v100
      %vm102 = vcmask 1024
      %103 = vst.msk [vmem:[%s5] sm:$0x3] %vm102, %v101
    $region33: #{tpu_custom_call.1} parent=1 // pred_fallthru
      _
    // Predicated region
    $region34: #{tpu_custom_call.1} parent=1 // pred_check
      _
    $region35: #{tpu_custom_call.1} parent=1 // pred_check_branch
      %105 = sbr.rel (0) target = $region37
    $region36: #{tpu_custom_call.1} parent=1 // pred_region
      _
    $region37: #{tpu_custom_call.1} parent=1 // pred_fallthru
      _
    // Predicated region
    $region38: #{tpu_custom_call.1} parent=1 // pred_check
      _
    $region39: #{tpu_custom_call.1} parent=1 // pred_check_branch
      %107 = sbr.rel (0) target = $region41
    $region40: #{tpu_custom_call.1} parent=1 // pred_region
      _
    $region41: #{tpu_custom_call.1} parent=1 // pred_fallthru
      _
    %108 = vsyncpa [#allocation5], 1

</llo_original>
